<compile_context>
chip_gen: v5e
topology: v5e:2x2
jax: 0.10.0
libtpu: 0.0.40
codegen_flags: <defaults>
</compile_context>

<pallas_src>
import functools

import jax
import jax.numpy as jnp
from jax.experimental import pallas as pl
from jax.experimental.pallas import tpu as pltpu


def _round_up(v, m):
    return ((v + m - 1) // m) * m


# ---------------------------------------------------------------------------
# Pallas kernel: all GIN layers fused, grid axis = layer index (sequential)
# ---------------------------------------------------------------------------
def _gin_fused_kernel(adj_hbm, x0_hbm, w1_ref, b1_ref, w2_ref, b2_ref,
                      o_ref, adj_scr, x_scr, *, num_layers, reassociate):
    layer = pl.program_id(0)

    # One-time copies into single-buffered VMEM scratch.  adj dominates the
    # VMEM footprint; keeping it out of the auto-pipeline avoids the default
    # 2x double-buffer that a constant-index BlockSpec would still reserve.
    @pl.when(layer == 0)
    def _():
        pltpu.sync_copy(adj_hbm, adj_scr)
        pltpu.sync_copy(x0_hbm, x_scr)

    adj = adj_scr[...]
    x = x_scr[...]
    w1 = w1_ref[0]
    b1 = b1_ref[0]
    w2 = w2_ref[0]
    b2 = b2_ref[0]

    if reassociate:
        # A' @ (X @ W1): shrinks the dominant N^2 matmul width to P_hid < P_x
        # and drops the f32->compute cast of an [N, P_x] intermediate.
        xw = jnp.dot(x, w1, preferred_element_type=jnp.float32).astype(x.dtype)
        pre1 = jnp.dot(adj, xw, preferred_element_type=jnp.float32) + b1
    else:
        h = jnp.dot(adj, x, preferred_element_type=jnp.float32)
        pre1 = jnp.dot(h.astype(w1.dtype), w1,
                       preferred_element_type=jnp.float32) + b1
    h1 = jnp.maximum(pre1, 0.0)
    out = jnp.dot(h1.astype(w2.dtype), w2,
                  preferred_element_type=jnp.float32) + b2

    # Final layer: emit the (non-ReLU'd) output, lane-dense (n_pad, p_out) slab.
    @pl.when(layer == num_layers - 1)
    def _():
        o_ref[...] = out[:, :o_ref.shape[1]].astype(o_ref.dtype)

    # Non-final layers: carry relu(out) in the resident activation scratch.
    # (Guarded so the dead VPU max + cast + store on the final step is skipped.)
    @pl.when(layer != num_layers - 1)
    def _():
        nxt = jnp.maximum(out, 0.0).astype(x_scr.dtype)
        p_x = x_scr.shape[1]
        p_y = nxt.shape[1]
        if p_y == p_x:
            x_scr[...] = nxt
        elif p_y > p_x:
            # Real non-final output width = hidden <= p_x; dropped cols are zero.
            x_scr[...] = nxt[:, :p_x]
        else:
            # 128-aligned static slices.
            x_scr[:, :p_y] = nxt
            x_scr[:, p_y:] = jnp.zeros((x_scr.shape[0], p_x - p_y), x_scr.dtype)


# ---------------------------------------------------------------------------
# Plain-JAX glue: densify edges (+ folded eps identity), padding, driver
# ---------------------------------------------------------------------------
def build_dense_adj(edge_index, edge_weight, num_nodes, *, eps=0.0, pad_to=None):
    """A'[dst, src] = sum of edge weights for edges src->dst, plus (1+eps) diag."""
    n_pad = num_nodes if pad_to is None else pad_to
    src, dst = edge_index[0], edge_index[1]
    adj = jnp.zeros((n_pad, n_pad), jnp.float32)
    adj = adj.at[dst, src].add(edge_weight.astype(jnp.float32))
    adj = adj + (1.0 + eps) * jnp.eye(n_pad, dtype=jnp.float32)
    return adj


def init_gin_params(key, in_channels, hidden_channels, out_channels, num_layers):
    """Deterministic params for num_layers GINConv MLPs (in->hid->out each)."""
    dims = [(in_channels, hidden_channels, hidden_channels)]
    for _ in range(num_layers - 2):
        dims.append((hidden_channels, hidden_channels, hidden_channels))
    dims.append((hidden_channels, hidden_channels, out_channels))

    params = []
    for (fi, fh, fo) in dims:
        key, k1, k2, k3, k4 = jax.random.split(key, 5)
        w1 = jax.random.normal(k1, (fi, fh), jnp.float32) / jnp.sqrt(fi)
        b1 = jax.random.normal(k2, (1, fh), jnp.float32) * 0.01
        w2 = jax.random.normal(k3, (fh, fo), jnp.float32) / jnp.sqrt(fh)
        b2 = jax.random.normal(k4, (1, fo), jnp.float32) * 0.01
        params.append((w1, b1, w2, b2))
    return params


def gin_forward(params, x, edge_index, edge_weight, node_type=None, *,
                eps=0.0, compute_dtype=jnp.bfloat16):
    """Full GIN forward in a single fused pallas_call."""
    del node_type  # unused by the reference forward; dropout p=0 (eval) = identity
    n, f_in = x.shape
    num_layers = len(params)
    hid = params[0][0].shape[1]
    f_out = params[-1][2].shape[1]
    cdt = jnp.dtype(compute_dtype)

    # Lane / MXU-tile dense padding: nodes and features to multiples of 128.
    # TODO(synk): prefer 256-multiples for moderate/large N on v6e/v7x (256x256 MXU).
    n_pad = _round_up(n, 128)
    p_in = _round_up(f_in, 128)
    p_hid = _round_up(hid, 128)
    p_out = _round_up(f_out, 128)
    p_x = max(p_in, p_hid)    # resident activation width == W1 input width
    p_y = max(p_hid, p_out)   # stacked W2 output width

    def pad2(a, r, c):
        return jnp.zeros((r, c), a.dtype).at[:a.shape[0], :a.shape[1]].set(a)

    adj = build_dense_adj(edge_index, edge_weight, n, eps=eps, pad_to=n_pad).astype(cdt)
    x_p = pad2(x.astype(jnp.float32), n_pad, p_x).astype(cdt)

    # Per-axis padded, per-layer stacked MLP weights (padded rows/cols = exact zeros).
    w1s = jnp.stack([pad2(w1, p_x, p_hid) for (w1, _, _, _) in params]).astype(cdt)
    b1s = jnp.stack([pad2(b1, 1, p_hid) for (_, b1, _, _) in params]).astype(jnp.float32)
    w2s = jnp.stack([pad2(w2, p_hid, p_y) for (_, _, w2, _) in params]).astype(cdt)
    b2s = jnp.stack([pad2(b2, 1, p_y) for (_, _, _, b2) in params]).astype(jnp.float32)

    # VMEM budget = actual footprint * 1.3 headroom, capped at ~90% of the
    # chip's physical VMEM (64 MiB/TC on v7x, 128 MiB on v5e/v6e).
    bpe = cdt.itemsize
    footprint = (n_pad * n_pad * bpe                      # adj scratch (single-buffered)
                 + n_pad * p_x * bpe                      # resident activation scratch
                 + 2 * (p_x * p_hid + p_hid * p_y) * bpe  # W1/W2 blocks (double-buffered)
                 + 2 * (p_hid + p_y) * 4                  # b1/b2 blocks
                 + 2 * n_pad * p_out * 4)                 # output block
    try:
        physical_vmem = pltpu.get_tpu_info().vmem_capacity_bytes
    except Exception:
        physical_vmem = 64 << 20  # smallest per-TensorCore capacity (v7x)
    vmem_limit = int(min(max(footprint * 1.3, 8 << 20), 0.9 * physical_vmem))

    kernel = functools.partial(_gin_fused_kernel, num_layers=num_layers,
                               reassociate=(p_x > p_hid))

    out_padded = pl.pallas_call(
        kernel,
        out_shape=jax.ShapeDtypeStruct((n_pad, p_out), jnp.float32),
        grid_spec=pltpu.PrefetchScalarGridSpec(
            num_scalar_prefetch=0,
            grid=(num_layers,),
            in_specs=[
                pl.BlockSpec(memory_space=pl.ANY),                     # adj (HBM; copied once)
                pl.BlockSpec(memory_space=pl.ANY),                     # x0  (HBM; copied once)
                pl.BlockSpec((1, p_x, p_hid), lambda l: (l, 0, 0)),    # w1[layer]
                pl.BlockSpec((1, 1, p_hid), lambda l: (l, 0, 0)),      # b1[layer]
                pl.BlockSpec((1, p_hid, p_y), lambda l: (l, 0, 0)),    # w2[layer]
                pl.BlockSpec((1, 1, p_y), lambda l: (l, 0, 0)),        # b2[layer]
            ],
            out_specs=pl.BlockSpec((n_pad, p_out), lambda l: (0, 0)),  # written on last layer
            scratch_shapes=[pltpu.VMEM((n_pad, n_pad), cdt),           # adj (single-buffered)
                            pltpu.VMEM((n_pad, p_x), cdt)],            # carried activation X
        ),
        compiler_params=pltpu.CompilerParams(
            dimension_semantics=("arbitrary",),  # layers are strictly sequential
            vmem_limit_bytes=vmem_limit,
        ),
    )(adj, x_p, w1s, b1s, w2s, b2s)

    return out_padded[:n, :f_out]


# ---------------------------------------------------------------------------
# Pure-JAX reference (mirrors the kernel's operand dtype, f32 accumulation)
# ---------------------------------------------------------------------------
def gin_forward_ref(params, x, edge_index, edge_weight, *, eps=0.0,
                    compute_dtype=jnp.float32):
    cdt = jnp.dtype(compute_dtype)
    n = x.shape[0]
    adj = build_dense_adj(edge_index, edge_weight, n, eps=eps).astype(cdt)
    xc = x.astype(cdt)
    num_layers = len(params)
    out = None
    hp = jax.lax.Precision.HIGHEST
    for i, (w1, b1, w2, b2) in enumerate(params):
        h = jnp.dot(adj, xc, preferred_element_type=jnp.float32, precision=hp)
        h1 = jnp.maximum(
            jnp.dot(h.astype(cdt), w1.astype(cdt),
                    preferred_element_type=jnp.float32, precision=hp) + b1, 0.0)
        out = jnp.dot(h1.astype(cdt), w2.astype(cdt),
                      preferred_element_type=jnp.float32, precision=hp) + b2
        if i != num_layers - 1:
            out = jnp.maximum(out, 0.0)
        xc = out.astype(cdt)
    return out


if __name__ == "__main__":
    # Small deterministic problem: N=64 nodes, E=256 edges,
    # in_channels=16, hidden_channels=32, out_channels=8, num_layers=3.
    N, E = 64, 256
    IN_C, HID_C, OUT_C = 16, 32, 8
    NUM_LAYERS = 3

    key = jax.random.PRNGKey(0)
    kx, ks, kd, kw, kt, kp = jax.random.split(key, 6)

    x = jax.random.normal(kx, (N, IN_C), jnp.float32)
    src = jax.random.randint(ks, (E,), 0, N)
    dst = jax.random.randint(kd, (E,), 0, N)
    edge_index = jnp.stack([src, dst], axis=0)             # [2, E]
    edge_weight = jax.random.uniform(kw, (E,), jnp.float32)
    node_type = jax.random.randint(kt, (N,), 0, 3)         # unused in forward

    params = init_gin_params(kp, IN_C, HID_C, OUT_C, NUM_LAYERS)

    # f32-operand path: strict check against the plain f32 reference.
    out_f32 = gin_forward(params, x, edge_index, edge_weight, node_type,
                          compute_dtype=jnp.float32)
    out_f32 = jax.block_until_ready(out_f32)
    ref_f32 = gin_forward_ref(params, x, edge_index, edge_weight,
                              compute_dtype=jnp.float32)
    assert out_f32.shape == (N, OUT_C), out_f32.shape
    assert jnp.allclose(out_f32, ref_f32, atol=1e-2, rtol=1e-2), \
        f"f32 mismatch, max abs err {float(jnp.max(jnp.abs(out_f32 - ref_f32)))}"

    # bf16-operand path (default fast MXU path): check against a bf16-matched reference.
    out_bf16 = gin_forward(params, x, edge_index, edge_weight, node_type,
                           compute_dtype=jnp.bfloat16)
    out_bf16 = jax.block_until_ready(out_bf16)
    ref_bf16 = gin_forward_ref(params, x, edge_index, edge_weight,
                               compute_dtype=jnp.bfloat16)
    assert out_bf16.shape == (N, OUT_C), out_bf16.shape
    assert jnp.allclose(out_bf16, ref_bf16, atol=3e-2, rtol=3e-2), \
        f"bf16 mismatch, max abs err {float(jnp.max(jnp.abs(out_bf16 - ref_bf16)))}"

    print("KERNEL_OK")
</pallas_src>

<mosaic_0001>
module attributes {stable_mosaic.version = 11 : i64} {
  func.func @_gin_fused_kernel(%arg0: i32, %arg1: memref<128x128xf32, #tpu.memory_space<any>>, %arg2: memref<128x128xf32, #tpu.memory_space<any>>, %arg3: memref<1x128x128xf32, #tpu.memory_space<vmem>>, %arg4: memref<1x1x128xf32, #tpu.memory_space<vmem>>, %arg5: memref<1x128x128xf32, #tpu.memory_space<vmem>>, %arg6: memref<1x1x128xf32, #tpu.memory_space<vmem>>, %arg7: memref<128x128xf32, #tpu.memory_space<vmem>>, %arg8: memref<128x128xf32, #tpu.memory_space<vmem>>, %arg9: memref<128x128xf32, #tpu.memory_space<vmem>>) attributes {dimension_semantics = [#tpu.dimension_semantics<arbitrary>], iteration_bounds = array<i64: 3>, scalar_prefetch = 0 : i64, scratch_operands = 2 : i64, tpu.core_type = #tpu.core_type<tc>, window_params = [{}, {}, {transform_indices = @transform_2, window_bounds = array<i64: 1, 128, 128>}, {transform_indices = @transform_3, window_bounds = array<i64: 1, 1, 128>}, {transform_indices = @transform_4, window_bounds = array<i64: 1, 128, 128>}, {transform_indices = @transform_5, window_bounds = array<i64: 1, 1, 128>}, {pipeline_mode = #tpu.pipeline_mode<synchronous>, transform_indices = @transform_6, window_bounds = array<i64: 128, 128>}]} {
    %c0_i32 = arith.constant 0 : i32
    %0 = arith.cmpi eq, %arg0, %c0_i32 : i32
    %1 = arith.extui %0 : i1 to i32
    %c0_i32_0 = arith.constant 0 : i32
    %2 = arith.cmpi ne, %1, %c0_i32_0 : i32
    scf.if %2 {
      "tpu.region"() ({
        %28 = tpu.sem_alloc : memref<!tpu.dma_semaphore, #tpu.memory_space<semaphore_mem>>
        tpu.enqueue_dma source(%arg1 : memref<128x128xf32, #tpu.memory_space<any>>) target(%arg8 : memref<128x128xf32, #tpu.memory_space<vmem>>) target_semaphore(%28 : memref<!tpu.dma_semaphore, #tpu.memory_space<semaphore_mem>>)
        tpu.wait_dma2 semaphore(%28 : memref<!tpu.dma_semaphore, #tpu.memory_space<semaphore_mem>>) src(%arg1 : memref<128x128xf32, #tpu.memory_space<any>>) dst(%arg8 : memref<128x128xf32, #tpu.memory_space<vmem>>)
        tpu.yield
      }) : () -> ()
      "tpu.region"() ({
        %28 = tpu.sem_alloc : memref<!tpu.dma_semaphore, #tpu.memory_space<semaphore_mem>>
        tpu.enqueue_dma source(%arg2 : memref<128x128xf32, #tpu.memory_space<any>>) target(%arg9 : memref<128x128xf32, #tpu.memory_space<vmem>>) target_semaphore(%28 : memref<!tpu.dma_semaphore, #tpu.memory_space<semaphore_mem>>)
        tpu.wait_dma2 semaphore(%28 : memref<!tpu.dma_semaphore, #tpu.memory_space<semaphore_mem>>) src(%arg2 : memref<128x128xf32, #tpu.memory_space<any>>) dst(%arg9 : memref<128x128xf32, #tpu.memory_space<vmem>>)
        tpu.yield
      }) : () -> ()
    } else {
    }
    %c0 = arith.constant 0 : index
    %c0_1 = arith.constant 0 : index
    %3 = vector.load %arg8[%c0, %c0_1] : memref<128x128xf32, #tpu.memory_space<vmem>>, vector<128x128xf32>
    %c0_2 = arith.constant 0 : index
    %c0_3 = arith.constant 0 : index
    %4 = vector.load %arg9[%c0_2, %c0_3] : memref<128x128xf32, #tpu.memory_space<vmem>>, vector<128x128xf32>
    %c0_4 = arith.constant 0 : index
    %c0_5 = arith.constant 0 : index
    %c0_6 = arith.constant 0 : index
    %5 = vector.load %arg3[%c0_4, %c0_5, %c0_6] : memref<1x128x128xf32, #tpu.memory_space<vmem>>, vector<1x128x128xf32>
    %6 = vector.shape_cast %5 : vector<1x128x128xf32> to vector<128x128xf32>
    %c0_7 = arith.constant 0 : index
    %c0_8 = arith.constant 0 : index
    %c0_9 = arith.constant 0 : index
    %7 = vector.load %arg4[%c0_7, %c0_8, %c0_9] : memref<1x1x128xf32, #tpu.memory_space<vmem>>, vector<1x1x128xf32>
    %8 = vector.shape_cast %7 : vector<1x1x128xf32> to vector<1x128xf32>
    %c0_10 = arith.constant 0 : index
    %c0_11 = arith.constant 0 : index
    %c0_12 = arith.constant 0 : index
    %9 = vector.load %arg5[%c0_10, %c0_11, %c0_12] : memref<1x128x128xf32, #tpu.memory_space<vmem>>, vector<1x128x128xf32>
    %10 = vector.shape_cast %9 : vector<1x128x128xf32> to vector<128x128xf32>
    %c0_13 = arith.constant 0 : index
    %c0_14 = arith.constant 0 : index
    %c0_15 = arith.constant 0 : index
    %11 = vector.load %arg6[%c0_13, %c0_14, %c0_15] : memref<1x1x128xf32, #tpu.memory_space<vmem>>, vector<1x1x128xf32>
    %12 = vector.shape_cast %11 : vector<1x1x128xf32> to vector<1x128xf32>
    %cst = arith.constant dense<0.000000e+00> : vector<128x128xf32>
    %13 = tpu.matmul %3, %4, %cst {dimension_numbers = #tpu.dot_dimension_numbers<[1], [0], [0], [1], [0, 0, 1, 1], [], []>} : vector<128x128xf32>, vector<128x128xf32>, vector<128x128xf32> -> vector<128x128xf32>
    %cst_16 = arith.constant dense<0.000000e+00> : vector<128x128xf32>
    %14 = tpu.matmul %13, %6, %cst_16 {dimension_numbers = #tpu.dot_dimension_numbers<[1], [0], [0], [1], [0, 0, 1, 1], [], []>} : vector<128x128xf32>, vector<128x128xf32>, vector<128x128xf32> -> vector<128x128xf32>
    %15 = vector.broadcast %8 : vector<1x128xf32> to vector<128x128xf32>
    %16 = arith.addf %14, %15 : vector<128x128xf32>
    %cst_17 = arith.constant 0.000000e+00 : f32
    %17 = vector.broadcast %cst_17 : f32 to vector<128x128xf32>
    %18 = arith.maximumf %16, %17 : vector<128x128xf32>
    %cst_18 = arith.constant dense<0.000000e+00> : vector<128x128xf32>
    %19 = tpu.matmul %18, %10, %cst_18 {dimension_numbers = #tpu.dot_dimension_numbers<[1], [0], [0], [1], [0, 0, 1, 1], [], []>} : vector<128x128xf32>, vector<128x128xf32>, vector<128x128xf32> -> vector<128x128xf32>
    %20 = vector.broadcast %12 : vector<1x128xf32> to vector<128x128xf32>
    %21 = arith.addf %19, %20 : vector<128x128xf32>
    %c2_i32 = arith.constant 2 : i32
    %22 = arith.cmpi eq, %arg0, %c2_i32 : i32
    %23 = arith.extui %22 : i1 to i32
    %c0_i32_19 = arith.constant 0 : i32
    %24 = arith.cmpi ne, %23, %c0_i32_19 : i32
    scf.if %24 {
      %c0_22 = arith.constant 0 : index
      %c0_23 = arith.constant 0 : index
      %28 = vector.load %arg7[%c0_22, %c0_23] : memref<128x128xf32, #tpu.memory_space<vmem>>, vector<128x128xf32>
      tpu.vector_store %arg7[%c0_22, %c0_23], %21 {strides = array<i32>} : memref<128x128xf32, #tpu.memory_space<vmem>>, vector<128x128xf32>,
    } else {
    }
    %c2_i32_20 = arith.constant 2 : i32
    %25 = arith.cmpi ne, %arg0, %c2_i32_20 : i32
    %26 = arith.extui %25 : i1 to i32
    %c0_i32_21 = arith.constant 0 : i32
    %27 = arith.cmpi ne, %26, %c0_i32_21 : i32
    scf.if %27 {
      %cst_22 = arith.constant 0.000000e+00 : f32
      %28 = vector.broadcast %cst_22 : f32 to vector<128x128xf32>
      %29 = arith.maximumf %21, %28 : vector<128x128xf32>
      %c0_23 = arith.constant 0 : index
      %c0_24 = arith.constant 0 : index
      %30 = vector.load %arg9[%c0_23, %c0_24] : memref<128x128xf32, #tpu.memory_space<vmem>>, vector<128x128xf32>
      tpu.vector_store %arg9[%c0_23, %c0_24], %29 {strides = array<i32>} : memref<128x128xf32, #tpu.memory_space<vmem>>, vector<128x128xf32>,
    } else {
    }
    return
  }
  func.func @transform_2(%arg0: i32) -> (i32, i32, i32) {
    %c0_i32 = arith.constant 0 : i32
    %c0_i32_0 = arith.constant 0 : i32
    %c0_i32_1 = arith.constant 0 : i32
    return %arg0, %c0_i32, %c0_i32_0 : i32, i32, i32
  }
  func.func @transform_3(%arg0: i32) -> (i32, i32, i32) {
    %c0_i32 = arith.constant 0 : i32
    %c0_i32_0 = arith.constant 0 : i32
    %c0_i32_1 = arith.constant 0 : i32
    return %arg0, %c0_i32, %c0_i32_0 : i32, i32, i32
  }
  func.func @transform_4(%arg0: i32) -> (i32, i32, i32) {
    %c0_i32 = arith.constant 0 : i32
    %c0_i32_0 = arith.constant 0 : i32
    %c0_i32_1 = arith.constant 0 : i32
    return %arg0, %c0_i32, %c0_i32_0 : i32, i32, i32
  }
  func.func @transform_5(%arg0: i32) -> (i32, i32, i32) {
    %c0_i32 = arith.constant 0 : i32
    %c0_i32_0 = arith.constant 0 : i32
    %c0_i32_1 = arith.constant 0 : i32
    return %arg0, %c0_i32, %c0_i32_0 : i32, i32, i32
  }
  func.func @transform_6(%arg0: i32) -> (i32, i32) {
    %c0_i32 = arith.constant 0 : i32
    %c0_i32_0 = arith.constant 0 : i32
    %c0_i32_1 = arith.constant 0 : i32
    return %c0_i32, %c0_i32_0 : i32, i32
  }
}

</mosaic_0001>

<llo_original>
// kernel: tpu_custom_call.1
$region0: #{tpu_custom_call.1}
  #allocation0 [shape = 'u32[]', space=smem, size = 0x4, offset = 0x4, fixed_abs, tag = 'smem constant byte address 0x4 - core index']
  #allocation1 [shape = 'u32[72,128]{1,0:T(1,128)}', space=vmem, size = 0x9000, scoped, tag = 'internal scratch']
  #allocation2 [shape = 'f32[128,128]{1,0:T(8,128)}', space=vmem, size = 0x10000, scoped, tag = 'scratch operand']
  #allocation3 [shape = 'f32[128,128]{1,0:T(8,128)}', space=vmem, size = 0x10000, scoped, tag = 'scratch operand']
  #allocation12 [shape = 's32[]', space=sflag, size = 0x4, offset = 0, fixed_abs, tag = 'sflag constant byte address 0x0 - dummy sync flag']
  #allocation13 [shape = 's32[]', space=sflag, size = 0x4, offset = 0, fixed_abs, tag = 'sflag constant byte address 0x0 - dummy sync flag']
  #allocation14 [shape = 'u32[]', space=smem, size = 0x4, offset = 0x44, fixed_abs, tag = 'smem constant byte address 0x44 - assertion arg 0']
  #allocation15 [shape = 'u32[]', space=smem, size = 0x4, offset = 0x48, fixed_abs, tag = 'smem constant byte address 0x48 - assertion arg 1']
  #allocation17 [shape = 's32[]', space=sflag, size = 0x4, offset = 0, fixed_abs, tag = 'sflag constant byte address 0x0 - dummy sync flag']
  #allocation18 [shape = 's32[]', space=sflag, size = 0x4, offset = 0, fixed_abs, tag = 'sflag constant byte address 0x0 - dummy sync flag']
  %s0 = inlined_call_operand.hbm [shape: f32[128,128], index: 0, kind: input, shape index: {}]
  %s1 = inlined_call_operand.hbm [shape: f32[128,128], index: 1, kind: input, shape index: {}]
  %s2 = inlined_call_operand.hbm [shape: f32[3,128,128], index: 2, kind: input, shape index: {}]
  %s3 = inlined_call_operand.hbm [shape: f32[3,1,128], index: 3, kind: input, shape index: {}]
  %s4 = inlined_call_operand.hbm [shape: f32[3,128,128], index: 4, kind: input, shape index: {}]
  %s5 = inlined_call_operand.vmem [shape: f32[3,1,128], index: 5, kind: input, shape index: {}]
  %s6 = inlined_call_operand.hbm [shape: f32[128,128], index: 6, kind: output, shape index: {}]
  %s7 = sld [smem:[#allocation0]]
  $region83: #{tpu_custom_call.1} parent=0
    _
  %s9 = ssub.s32 1, %s7
  %s10 = scalar_select 0, %s9, %s7
  $region1: #{tpu_custom_call.1} parent=0
    #allocation4 [shape = 'u8[131072]{0}', space=vmem, size = 0x20000, scoped, tag = 'input window, operand 2']
    #allocation5 [shape = 's32[2]{0}', space=sflag, size = 0x8, scoped, tag = 'scoped memory for tpu_custom_call.1']
    #allocation6 [shape = 's32[2]{0}', space=sflag, size = 0x8, scoped, tag = 'scoped memory for tpu_custom_call.1']
    #allocation7 [shape = 'u8[1024]{0}', space=vmem, size = 0x400, scoped, tag = 'input window, operand 3']
    #allocation8 [shape = 's32[2]{0}', space=sflag, size = 0x8, scoped, tag = 'scoped memory for tpu_custom_call.1']
    #allocation9 [shape = 'u8[131072]{0}', space=vmem, size = 0x20000, scoped, tag = 'input window, operand 4']
    #allocation10 [shape = 'u8[65536]{0}', space=vmem, size = 0x10000, scoped, tag = 'output window, operand 0, single buffered']
    %11 = vsyncpa [#allocation5], 0
    %s12 = scalar_lea.sflag [#allocation5], 1
    %13 = vsyncpa %s12, 0
    %14 = vsyncpa [#allocation8], 0
    %s15 = scalar_lea.sflag [#allocation8], 1
    %16 = vsyncpa %s15, 0
    %17 = vsyncpa [#allocation6], 0
    loop: start=0, step=1, limit=5
    $region2: #{tpu_custom_call.1} parent=1 // loop_pre_header
      _
    $region3: #{tpu_custom_call.1} parent=1 // loop_header
      %s19 = sphi 0, %s23
      %p20 = scmp.ge.s32.totalorder %s19, 5
      %s29 = sphi 0, %s31
      %s32 = sphi 0, %s29
      %s33 = sphi 0, %s32
      %s49 = sphi 0, %s33
      %s55 = sphi 0, %s57
      %s58 = sphi 0, %s55
      %s59 = sphi 0, %s58
      %s75 = sphi 0, %s59
      %s81 = sphi 0, %s83
      %s84 = sphi 0, %s81
      %s85 = sphi 0, %s84
      %s101 = sphi 0, %s85
      %s107 = sphi 0, %s109
      %s110 = sphi 0, %s107
      %s111 = sphi 0, %s110
      %s127 = sphi 0, %s111
      %s131 = sphi 0, %s131
      %s133 = sphi 0, %s131
      %s134 = sphi 0, %s133
      %s148 = sphi 0, %s134
    $region4: #{tpu_custom_call.1} parent=1 // loop_header_branch
      %22 = sbr.rel (%p20) target = $region8
    $region5: #{tpu_custom_call.1} parent=1 // loop_body
      %s24 = ssub.s32 %s19, 1
      %s25 = ssub.s32 %s19, 2
      %s26 = sadd.s32 %s19, 1
      %s27 = ssub.s32 %s19, %s26
      %p28 = scmp.eq.s32.totalorder %s27, 0
      %s30 = sadd.s32 %s29, 1
      %s31 = scalar_select %p28, %s29, %s30
      %p34 = pneg %p28
      %p35 = scmp.eq.s32.totalorder %s19, 2
      %p36 = por %p34, %p35
      %p37 = scmp.ne.s32.totalorder %s29, %s32
      %p38 = scmp.eq.s32.totalorder %s19, 0
      %p39 = por %p37, %p38
      %p40 = scmp.ne.s32.totalorder %s29, %s32
      %p41 = scmp.eq.s32.totalorder %s24, 2
      %p42 = por %p40, %p41
      %p43 = scmp.ne.s32.totalorder %s32, %s33
      %p44 = scmp.eq.s32.totalorder %s24, 0
      %p45 = por %p43, %p44
      %p46 = scmp.ne.s32.totalorder %s32, %s33
      %p47 = scmp.eq.s32.totalorder %s25, 2
      %p48 = por %p46, %p47
      %p50 = scmp.ne.s32.totalorder %s33, %s49
      %p51 = scmp.eq.s32.totalorder %s25, 0
      %p52 = por %p50, %p51
      %s53 = ssub.s32 %s19, %s26
      %p54 = scmp.eq.s32.totalorder %s53, 0
      %s56 = sadd.s32 %s55, 1
      %s57 = scalar_select %p54, %s55, %s56
      %p60 = pneg %p54
      %p61 = scmp.eq.s32.totalorder %s19, 2
      %p62 = por %p60, %p61
      %p63 = scmp.ne.s32.totalorder %s55, %s58
      %p64 = scmp.eq.s32.totalorder %s19, 0
      %p65 = por %p63, %p64
      %p66 = scmp.ne.s32.totalorder %s55, %s58
      %p67 = scmp.eq.s32.totalorder %s24, 2
      %p68 = por %p66, %p67
      %p69 = scmp.ne.s32.totalorder %s58, %s59
      %p70 = scmp.eq.s32.totalorder %s24, 0
      %p71 = por %p69, %p70
      %p72 = scmp.ne.s32.totalorder %s58, %s59
      %p73 = scmp.eq.s32.totalorder %s25, 2
      %p74 = por %p72, %p73
      %p76 = scmp.ne.s32.totalorder %s59, %s75
      %p77 = scmp.eq.s32.totalorder %s25, 0
      %p78 = por %p76, %p77
      %s79 = ssub.s32 %s19, %s26
      %p80 = scmp.eq.s32.totalorder %s79, 0
      %s82 = sadd.s32 %s81, 1
      %s83 = scalar_select %p80, %s81, %s82
      %p86 = pneg %p80
      %p87 = scmp.eq.s32.totalorder %s19, 2
      %p88 = por %p86, %p87
      %p89 = scmp.ne.s32.totalorder %s81, %s84
      %p90 = scmp.eq.s32.totalorder %s19, 0
      %p91 = por %p89, %p90
      %p92 = scmp.ne.s32.totalorder %s81, %s84
      %p93 = scmp.eq.s32.totalorder %s24, 2
      %p94 = por %p92, %p93
      %p95 = scmp.ne.s32.totalorder %s84, %s85
      %p96 = scmp.eq.s32.totalorder %s24, 0
      %p97 = por %p95, %p96
      %p98 = scmp.ne.s32.totalorder %s84, %s85
      %p99 = scmp.eq.s32.totalorder %s25, 2
      %p100 = por %p98, %p99
      %p102 = scmp.ne.s32.totalorder %s85, %s101
      %p103 = scmp.eq.s32.totalorder %s25, 0
      %p104 = por %p102, %p103
      %s105 = ssub.s32 %s19, %s26
      %p106 = scmp.eq.s32.totalorder %s105, 0
      %s108 = sadd.s32 %s107, 1
      %s109 = scalar_select %p106, %s107, %s108
      %p112 = pneg %p106
      %p113 = scmp.eq.s32.totalorder %s19, 2
      %p114 = por %p112, %p113
      %p115 = scmp.ne.s32.totalorder %s107, %s110
      %p116 = scmp.eq.s32.totalorder %s19, 0
      %p117 = por %p115, %p116
      %p118 = scmp.ne.s32.totalorder %s107, %s110
      %p119 = scmp.eq.s32.totalorder %s24, 2
      %p120 = por %p118, %p119
      %p121 = scmp.ne.s32.totalorder %s110, %s111
      %p122 = scmp.eq.s32.totalorder %s24, 0
      %p123 = por %p121, %p122
      %p124 = scmp.ne.s32.totalorder %s110, %s111
      %p125 = scmp.eq.s32.totalorder %s25, 2
      %p126 = por %p124, %p125
      %p128 = scmp.ne.s32.totalorder %s111, %s127
      %p129 = scmp.eq.s32.totalorder %s25, 0
      %p130 = por %p128, %p129
      %s132 = sadd.s32 %s131, 1
      %p135 = scmp.eq.s32.totalorder %s19, 2
      %p136 = scmp.ne.s32.totalorder %s131, %s133
      %p137 = scmp.eq.s32.totalorder %s19, 0
      %p138 = por %p136, %p137
      %p139 = scmp.ne.s32.totalorder %s131, %s133
      %p140 = scmp.eq.s32.totalorder %s24, 2
      %p141 = por %p139, %p140
      %p142 = scmp.ne.s32.totalorder %s133, %s134
      %p143 = scmp.eq.s32.totalorder %s24, 0
      %p144 = por %p142, %p143
      %p145 = scmp.ne.s32.totalorder %s133, %s134
      %p146 = scmp.eq.s32.totalorder %s25, 2
      %p147 = por %p145, %p146
      %p149 = scmp.ne.s32.totalorder %s134, %s148
      %p150 = scmp.eq.s32.totalorder %s25, 0
      %p151 = por %p149, %p150
      %p152 = scmp.le.s32.totalorder 1, %s19
      %p153 = scmp.lt.s32.totalorder %s19, 4
      %p154 = pnand %p152, %p153
      %p155 = pneg %p154
      // Predicated region
      $region9: #{tpu_custom_call.1} parent=5 // pred_check
        _
      $region10: #{tpu_custom_call.1} parent=5 // pred_check_branch
        %157 = sbr.rel (%p154) target = $region12
      $region11: #{tpu_custom_call.1} parent=5 // pred_region
        %s158 = ssub.s32 %s19, 1
      $region12: #{tpu_custom_call.1} parent=5 // pred_fallthru
        _
      %p159 = scmp.lt.s32.totalorder %s19, 3
      // Predicated region
      $region13: #{tpu_custom_call.1} parent=5 // pred_check
        %p160 = pneg %p159
      $region14: #{tpu_custom_call.1} parent=5 // pred_check_branch
        %162 = sbr.rel (%p160) target = $region16
      $region15: #{tpu_custom_call.1} parent=5 // pred_region
        // Predicated region
        $region17: #{tpu_custom_call.1} parent=15 // pred_check
          %p163 = pneg %p39
        $region18: #{tpu_custom_call.1} parent=15 // pred_check_branch
          %165 = sbr.rel (%p163) target = $region20
        $region19: #{tpu_custom_call.1} parent=15 // pred_region
          %s166 = sand.u32 %s29, 1
          %s167 = scalar_lea.sflag [#allocation5], %s166
          %s168 = sand.u32 %s29, 1
          %s169 = smul.addr %s168, 128
          %s170 = scalar_lea.vmem [#allocation4], %s169
          %172 = vsyncadd %s167, 0
          %s173 = smul.addr %s19, 16
          %s174 = smul.addr %s173, 8
          %s175 = scalar_lea.hbm %s2, %s174
          %s176 = sshll.u32 %s175, 4
          %s177 = int_to_ptr.hbm [resolvable:$true] %s176
          %s178 = sshll.u32 %s170, 4
          %s179 = int_to_ptr.vmem [resolvable:$true] %s178
          %184 = dma.hbm_to_vmem [thread:$0]  %s177, 2048, %s179, %s167, 128, 128, 8
        $region20: #{tpu_custom_call.1} parent=15 // pred_fallthru
          _
        // Predicated region
        $region21: #{tpu_custom_call.1} parent=15 // pred_check
          %p185 = pneg %p65
        $region22: #{tpu_custom_call.1} parent=15 // pred_check_branch
          %187 = sbr.rel (%p185) target = $region24
        $region23: #{tpu_custom_call.1} parent=15 // pred_region
          %s188 = sand.u32 %s19, 1
          %s189 = scalar_lea.sflag [#allocation8], %s188
          %s190 = sand.u32 %s55, 1
          %s191 = scalar_lea.vmem [#allocation7], %s190
          %193 = vsyncadd %s189, 0
          %s194 = scalar_lea.hbm %s3, %s19
          %s196 = sshll.u32 %s194, 4
          %s197 = int_to_ptr.hbm [resolvable:$true] %s196
          %s198 = sshll.u32 %s191, 4
          %s199 = int_to_ptr.vmem [resolvable:$true] %s198
          %201 = dma.hbm_to_vmem [thread:$0]  %s197, 16, %s199, %s189
        $region24: #{tpu_custom_call.1} parent=15 // pred_fallthru
          _
        // Predicated region
        $region25: #{tpu_custom_call.1} parent=15 // pred_check
          %p202 = pneg %p91
        $region26: #{tpu_custom_call.1} parent=15 // pred_check_branch
          %204 = sbr.rel (%p202) target = $region28
        $region27: #{tpu_custom_call.1} parent=15 // pred_region
          %s205 = sand.u32 %s19, 1
          %s206 = scalar_lea.sflag [#allocation8], %s205
          %s207 = sand.u32 %s81, 1
          %s208 = smul.addr %s207, 128
          %s209 = scalar_lea.vmem [#allocation9], %s208
          %211 = vsyncadd %s206, 0
          %s212 = smul.addr %s19, 16
          %s213 = smul.addr %s212, 8
          %s214 = scalar_lea.hbm %s4, %s213
          %s215 = sshll.u32 %s214, 4
          %s216 = int_to_ptr.hbm [resolvable:$true] %s215
          %s217 = sshll.u32 %s209, 4
          %s218 = int_to_ptr.vmem [resolvable:$true] %s217
          %223 = dma.hbm_to_vmem [thread:$0]  %s216, 2048, %s218, %s206, 128, 128, 8
        $region28: #{tpu_custom_call.1} parent=15 // pred_fallthru
          _
        // Predicated region
        $region29: #{tpu_custom_call.1} parent=15 // pred_check
          %p224 = pneg %p117
        $region30: #{tpu_custom_call.1} parent=15 // pred_check_branch
          %226 = sbr.rel (%p224) target = $region32
        $region31: #{tpu_custom_call.1} parent=15 // pred_region
          %p227 = scmp.lt.s32.totalorder %s19, 2
          %s228 = scalar_select %p227, %s19, 2
          %s229 = scalar_lea.vmem %s5, %s228
        $region32: #{tpu_custom_call.1} parent=15 // pred_fallthru
          _
      $region16: #{tpu_custom_call.1} parent=5 // pred_fallthru
        _
      %p230 = scmp.le.s32.totalorder 1, %s19
      %p231 = scmp.lt.s32.totalorder %s19, 4
      %p232 = pnand %p230, %p231
      %p233 = pneg %p232
      // Predicated region
      $region33: #{tpu_custom_call.1} parent=5 // pred_check
        _
      $region34: #{tpu_custom_call.1} parent=5 // pred_check_branch
        %235 = sbr.rel (%p232) target = $region36
      $region35: #{tpu_custom_call.1} parent=5 // pred_region
        %s236 = ssub.s32 %s19, 1
        %s237 = sand.u32 %s32, 1
        %s238 = scalar_lea.sflag [#allocation5], %s237
        %s239 = sand.u32 %s32, 1
        %s240 = smul.addr %s239, 128
        %s241 = scalar_lea.vmem [#allocation4], %s240
        // Predicated region
        $region37: #{tpu_custom_call.1} parent=35 // pred_check
          %p242 = pneg %p45
        $region38: #{tpu_custom_call.1} parent=35 // pred_check_branch
          %244 = sbr.rel (%p242) target = $region40
        $region39: #{tpu_custom_call.1} parent=35 // pred_region
          %246 = dma.done %s238, 2048
        $region40: #{tpu_custom_call.1} parent=35 // pred_fallthru
          _
        %s247 = sand.u32 %s24, 1
        %s248 = scalar_lea.sflag [#allocation8], %s247
        %s249 = sand.u32 %s58, 1
        %s250 = scalar_lea.vmem [#allocation7], %s249
        // Predicated region
        $region41: #{tpu_custom_call.1} parent=35 // pred_check
          %p251 = pneg %p71
        $region42: #{tpu_custom_call.1} parent=35 // pred_check_branch
          %253 = sbr.rel (%p251) target = $region44
        $region43: #{tpu_custom_call.1} parent=35 // pred_region
          %255 = dma.done %s248, 16
        $region44: #{tpu_custom_call.1} parent=35 // pred_fallthru
          _
        %s256 = sand.u32 %s24, 1
        %s257 = scalar_lea.sflag [#allocation8], %s256
        %s258 = sand.u32 %s84, 1
        %s259 = smul.addr %s258, 128
        %s260 = scalar_lea.vmem [#allocation9], %s259
        // Predicated region
        $region45: #{tpu_custom_call.1} parent=35 // pred_check
          %p261 = pneg %p97
        $region46: #{tpu_custom_call.1} parent=35 // pred_check_branch
          %263 = sbr.rel (%p261) target = $region48
        $region47: #{tpu_custom_call.1} parent=35 // pred_region
          %265 = dma.done %s257, 2048
        $region48: #{tpu_custom_call.1} parent=35 // pred_fallthru
          _
        %s266 = sand.u32 %s32, 1
        %s267 = scalar_lea.sflag [#allocation5], %s266
        %s268 = sand.u32 %s32, 1
        %s269 = smul.addr %s268, 128
        %s270 = scalar_lea.vmem [#allocation4], %s269
        %p271 = pneg %p45
        %p272 = pneg %p42
        %s273 = sand.u32 %s24, 1
        %s274 = scalar_lea.sflag [#allocation8], %s273
        %s275 = sand.u32 %s58, 1
        %s276 = scalar_lea.vmem [#allocation7], %s275
        %p277 = pneg %p71
        %p278 = pneg %p68
        %s279 = sand.u32 %s24, 1
        %s280 = scalar_lea.sflag [#allocation8], %s279
        %s281 = sand.u32 %s84, 1
        %s282 = smul.addr %s281, 128
        %s283 = scalar_lea.vmem [#allocation9], %s282
        %p284 = pneg %p97
        %p285 = pneg %p94
        %p286 = scmp.lt.s32.totalorder %s24, 2
        %s287 = scalar_select %p286, %s24, 2
        %s288 = scalar_lea.vmem %s5, %s287
        %p289 = pneg %p123
        %p290 = pneg %p120
        %p291 = pneg %p144
        %p292 = pneg %p141
        %p293 = scmp.lt.s32.totalorder %s24, 2
        %s294 = scalar_select %p293, %s24, 2
        %s295 = scalar_lea.vmem %s5, %s294
        %p296 = scmp.eq.s32.totalorder %s24, 0
        // Predicated region
        $region49: #{tpu_custom_call.1} parent=35 // pred_check
          %p297 = pneg %p296
        $region50: #{tpu_custom_call.1} parent=35 // pred_check_branch
          %299 = sbr.rel (%p297) target = $region52
        $region51: #{tpu_custom_call.1} parent=35 // pred_region
          $region53: #{tpu_custom_call.1} parent=51
            #allocation11 [shape = 's32[1]{0}', space=sflag, size = 0x4, scoped, tag = 'scoped memory for tpu_custom_call.1']
            // Predicated region
            $region54: #{tpu_custom_call.1} parent=53 // pred_check
              _
            $region55: #{tpu_custom_call.1} parent=53 // pred_check_branch
              %301 = sbr.rel target = $region57
            $region56: #{tpu_custom_call.1} parent=53 // pred_region
              %302 = sst [smem:[#allocation14]] [#allocation13]
              %303 = sst [smem:[#allocation15]] [#allocation12]
            $region57: #{tpu_custom_call.1} parent=53 // pred_fallthru
              _
            %305 = shalt.err (0)
            %s307 = sshll.u32 %s0, 4
            %s308 = int_to_ptr.hbm [resolvable:$true] %s307
            %s309 = sshll.u32 [#allocation2], 4
            %s310 = int_to_ptr.vmem [resolvable:$true] %s309
            %312 = dma.hbm_to_vmem [thread:$0]  %s308, 2048, %s310, [#allocation11]
            %s313 = smul.u32 128, 1
            %s314 = sshll.u32 %s313, 4
            %315 = dma.done [#allocation11], %s314
          $region58: #{tpu_custom_call.1} parent=51
            #allocation16 [shape = 's32[1]{0}', space=sflag, size = 0x4, scoped, tag = 'scoped memory for tpu_custom_call.1']
            // Predicated region
            $region59: #{tpu_custom_call.1} parent=58 // pred_check
              _
            $region60: #{tpu_custom_call.1} parent=58 // pred_check_branch
              %317 = sbr.rel target = $region62
            $region61: #{tpu_custom_call.1} parent=58 // pred_region
              %318 = sst [smem:[#allocation14]] [#allocation18]
              %319 = sst [smem:[#allocation15]] [#allocation17]
            $region62: #{tpu_custom_call.1} parent=58 // pred_fallthru
              _
            %321 = shalt.err (0)
            %s323 = sshll.u32 %s1, 4
            %s324 = int_to_ptr.hbm [resolvable:$true] %s323
            %s325 = sshll.u32 [#allocation3], 4
            %s326 = int_to_ptr.vmem [resolvable:$true] %s325
            %328 = dma.hbm_to_vmem [thread:$0]  %s324, 2048, %s326, [#allocation16]
            %s329 = smul.u32 128, 1
            %s330 = sshll.u32 %s329, 4
            %331 = dma.done [#allocation16], %s330
        $region52: #{tpu_custom_call.1} parent=35 // pred_fallthru
          _
        %v332 = vld [vmem:[#allocation2] sm:$0xff]
        %v333 = vld [vmem:[#allocation2 + $0x8] sm:$0xff]
        %v334 = vld [vmem:[#allocation2 + $0x10] sm:$0xff]
        %v335 = vld [vmem:[#allocation2 + $0x18] sm:$0xff]
        %v336 = vld [vmem:[#allocation2 + $0x20] sm:$0xff]
        %v337 = vld [vmem:[#allocation2 + $0x28] sm:$0xff]
        %v338 = vld [vmem:[#allocation2 + $0x30] sm:$0xff]
        %v339 = vld [vmem:[#allocation2 + $0x38] sm:$0xff]
        %v340 = vld [vmem:[#allocation2 + $0x40] sm:$0xff]
        %v341 = vld [vmem:[#allocation2 + $0x48] sm:$0xff]
        %v342 = vld [vmem:[#allocation2 + $0x50] sm:$0xff]
        %v343 = vld [vmem:[#allocation2 + $0x58] sm:$0xff]
        %v344 = vld [vmem:[#allocation2 + $0x60] sm:$0xff]
        %v345 = vld [vmem:[#allocation2 + $0x68] sm:$0xff]
        %v346 = vld [vmem:[#allocation2 + $0x70] sm:$0xff]
        %v347 = vld [vmem:[#allocation2 + $0x78] sm:$0xff]
        %v348 = vld [vmem:[#allocation3] sm:$0xff]
        %v349 = vld [vmem:[#allocation3 + $0x8] sm:$0xff]
        %v350 = vld [vmem:[#allocation3 + $0x10] sm:$0xff]
        %v351 = vld [vmem:[#allocation3 + $0x18] sm:$0xff]
        %v352 = vld [vmem:[#allocation3 + $0x20] sm:$0xff]
        %v353 = vld [vmem:[#allocation3 + $0x28] sm:$0xff]
        %v354 = vld [vmem:[#allocation3 + $0x30] sm:$0xff]
        %v355 = vld [vmem:[#allocation3 + $0x38] sm:$0xff]
        %v356 = vld [vmem:[#allocation3 + $0x40] sm:$0xff]
        %v357 = vld [vmem:[#allocation3 + $0x48] sm:$0xff]
        %v358 = vld [vmem:[#allocation3 + $0x50] sm:$0xff]
        %v359 = vld [vmem:[#allocation3 + $0x58] sm:$0xff]
        %v360 = vld [vmem:[#allocation3 + $0x60] sm:$0xff]
        %v361 = vld [vmem:[#allocation3 + $0x68] sm:$0xff]
        %v362 = vld [vmem:[#allocation3 + $0x70] sm:$0xff]
        %v363 = vld [vmem:[#allocation3 + $0x78] sm:$0xff]
        %v364 = vld [vmem:[%s241] sm:$0xff]
        %v365 = vld [vmem:[%s241 + $0x8] sm:$0xff]
        %v366 = vld [vmem:[%s241 + $0x10] sm:$0xff]
        %v367 = vld [vmem:[%s241 + $0x18] sm:$0xff]
        %v368 = vld [vmem:[%s241 + $0x20] sm:$0xff]
        %v369 = vld [vmem:[%s241 + $0x28] sm:$0xff]
        %v370 = vld [vmem:[%s241 + $0x30] sm:$0xff]
        %v371 = vld [vmem:[%s241 + $0x38] sm:$0xff]
        %v372 = vld [vmem:[%s241 + $0x40] sm:$0xff]
        %v373 = vld [vmem:[%s241 + $0x48] sm:$0xff]
        %v374 = vld [vmem:[%s241 + $0x50] sm:$0xff]
        %v375 = vld [vmem:[%s241 + $0x58] sm:$0xff]
        %v376 = vld [vmem:[%s241 + $0x60] sm:$0xff]
        %v377 = vld [vmem:[%s241 + $0x68] sm:$0xff]
        %v378 = vld [vmem:[%s241 + $0x70] sm:$0xff]
        %v379 = vld [vmem:[%s241 + $0x78] sm:$0xff]
        %v380 = vld [vmem:[%s250] sm:$0x1]
        %v381 = vld [vmem:[%s260] sm:$0xff]
        %v382 = vld [vmem:[%s260 + $0x8] sm:$0xff]
        %v383 = vld [vmem:[%s260 + $0x10] sm:$0xff]
        %v384 = vld [vmem:[%s260 + $0x18] sm:$0xff]
        %v385 = vld [vmem:[%s260 + $0x20] sm:$0xff]
        %v386 = vld [vmem:[%s260 + $0x28] sm:$0xff]
        %v387 = vld [vmem:[%s260 + $0x30] sm:$0xff]
        %v388 = vld [vmem:[%s260 + $0x38] sm:$0xff]
        %v389 = vld [vmem:[%s260 + $0x40] sm:$0xff]
        %v390 = vld [vmem:[%s260 + $0x48] sm:$0xff]
        %v391 = vld [vmem:[%s260 + $0x50] sm:$0xff]
        %v392 = vld [vmem:[%s260 + $0x58] sm:$0xff]
        %v393 = vld [vmem:[%s260 + $0x60] sm:$0xff]
        %v394 = vld [vmem:[%s260 + $0x68] sm:$0xff]
        %v395 = vld [vmem:[%s260 + $0x70] sm:$0xff]
        %v396 = vld [vmem:[%s260 + $0x78] sm:$0xff]
        %v397 = vld [vmem:[%s295] sm:$0x1]
        %398 = vmatpush.msra.mxu0 %v363
        %399 = vmatpush.msra.mxu0 %v362
        %400 = vmatpush.msra.mxu0 %v361
        %401 = vmatpush.msra.mxu0 %v360
        %402 = vmatpush.msra.mxu0 %v359
        %403 = vmatpush.msra.mxu0 %v358
        %404 = vmatpush.msra.mxu0 %v357
        %405 = vmatpush.msra.mxu0 %v356
        %406 = vmatpush.msra.mxu0 %v355
        %407 = vmatpush.msra.mxu0 %v354
        %408 = vmatpush.msra.mxu0 %v353
        %409 = vmatpush.msra.mxu0 %v352
        %410 = vmatpush.msra.mxu0 %v351
        %411 = vmatpush.msra.mxu0 %v350
        %412 = vmatpush.msra.mxu0 %v349
        %413 = vmatpush.msra.mxu0 %v348
        %414 = vmatmul.f32.gmra.mxu0 %v332
        %v415 = vpop.f32.mrf.mxu0
        %v416 = vadd.f32 0.0, %v415
        %417 = vmatmul.f32.gmra.mxu0 %v333
        %v418 = vpop.f32.mrf.mxu0
        %v419 = vadd.f32 0.0, %v418
        %420 = vmatmul.f32.gmra.mxu0 %v334
        %v421 = vpop.f32.mrf.mxu0
        %v422 = vadd.f32 0.0, %v421
        %423 = vmatmul.f32.gmra.mxu0 %v335
        %v424 = vpop.f32.mrf.mxu0
        %v425 = vadd.f32 0.0, %v424
        %426 = vmatmul.f32.gmra.mxu0 %v336
        %v427 = vpop.f32.mrf.mxu0
        %v428 = vadd.f32 0.0, %v427
        %429 = vmatmul.f32.gmra.mxu0 %v337
        %v430 = vpop.f32.mrf.mxu0
        %v431 = vadd.f32 0.0, %v430
        %432 = vmatmul.f32.gmra.mxu0 %v338
        %v433 = vpop.f32.mrf.mxu0
        %v434 = vadd.f32 0.0, %v433
        %435 = vmatmul.f32.gmra.mxu0 %v339
        %v436 = vpop.f32.mrf.mxu0
        %v437 = vadd.f32 0.0, %v436
        %438 = vmatmul.f32.gmra.mxu0 %v340
        %v439 = vpop.f32.mrf.mxu0
        %v440 = vadd.f32 0.0, %v439
        %441 = vmatmul.f32.gmra.mxu0 %v341
        %v442 = vpop.f32.mrf.mxu0
        %v443 = vadd.f32 0.0, %v442
        %444 = vmatmul.f32.gmra.mxu0 %v342
        %v445 = vpop.f32.mrf.mxu0
        %v446 = vadd.f32 0.0, %v445
        %447 = vmatmul.f32.gmra.mxu0 %v343
        %v448 = vpop.f32.mrf.mxu0
        %v449 = vadd.f32 0.0, %v448
        %450 = vmatmul.f32.gmra.mxu0 %v344
        %v451 = vpop.f32.mrf.mxu0
        %v452 = vadd.f32 0.0, %v451
        %453 = vmatmul.f32.gmra.mxu0 %v345
        %v454 = vpop.f32.mrf.mxu0
        %v455 = vadd.f32 0.0, %v454
        %456 = vmatmul.f32.gmra.mxu0 %v346
        %v457 = vpop.f32.mrf.mxu0
        %v458 = vadd.f32 0.0, %v457
        %459 = vmatmul.f32.gmra.mxu0 %v347
        %v460 = vpop.f32.mrf.mxu0
        %v461 = vadd.f32 0.0, %v460
        %462 = vdwg.mxu0
        %v464 = vperm.slane %v380, 0
        %466 = vmatpush.msra.mxu0 %v379
        %467 = vmatpush.msra.mxu0 %v378
        %468 = vmatpush.msra.mxu0 %v377
        %469 = vmatpush.msra.mxu0 %v376
        %470 = vmatpush.msra.mxu0 %v375
        %471 = vmatpush.msra.mxu0 %v374
        %472 = vmatpush.msra.mxu0 %v373
        %473 = vmatpush.msra.mxu0 %v372
        %474 = vmatpush.msra.mxu0 %v371
        %475 = vmatpush.msra.mxu0 %v370
        %476 = vmatpush.msra.mxu0 %v369
        %477 = vmatpush.msra.mxu0 %v368
        %478 = vmatpush.msra.mxu0 %v367
        %479 = vmatpush.msra.mxu0 %v366
        %480 = vmatpush.msra.mxu0 %v365
        %481 = vmatpush.msra.mxu0 %v364
        %482 = vmatmul.f32.gmra.mxu0 %v416
        %v483 = vpop.f32.mrf.mxu0
        %v484 = vadd.f32 %v464, %v483
        %485 = vmatmul.f32.gmra.mxu0 %v419
        %v486 = vpop.f32.mrf.mxu0
        %v487 = vadd.f32 %v464, %v486
        %488 = vmatmul.f32.gmra.mxu0 %v422
        %v489 = vpop.f32.mrf.mxu0
        %v490 = vadd.f32 %v464, %v489
        %491 = vmatmul.f32.gmra.mxu0 %v425
        %v492 = vpop.f32.mrf.mxu0
        %v493 = vadd.f32 %v464, %v492
        %494 = vmatmul.f32.gmra.mxu0 %v428
        %v495 = vpop.f32.mrf.mxu0
        %v496 = vadd.f32 %v464, %v495
        %497 = vmatmul.f32.gmra.mxu0 %v431
        %v498 = vpop.f32.mrf.mxu0
        %v499 = vadd.f32 %v464, %v498
        %500 = vmatmul.f32.gmra.mxu0 %v434
        %v501 = vpop.f32.mrf.mxu0
        %v502 = vadd.f32 %v464, %v501
        %503 = vmatmul.f32.gmra.mxu0 %v437
        %v504 = vpop.f32.mrf.mxu0
        %v505 = vadd.f32 %v464, %v504
        %506 = vmatmul.f32.gmra.mxu0 %v440
        %v507 = vpop.f32.mrf.mxu0
        %v508 = vadd.f32 %v464, %v507
        %509 = vmatmul.f32.gmra.mxu0 %v443
        %v510 = vpop.f32.mrf.mxu0
        %v511 = vadd.f32 %v464, %v510
        %512 = vmatmul.f32.gmra.mxu0 %v446
        %v513 = vpop.f32.mrf.mxu0
        %v514 = vadd.f32 %v464, %v513
        %515 = vmatmul.f32.gmra.mxu0 %v449
        %v516 = vpop.f32.mrf.mxu0
        %v517 = vadd.f32 %v464, %v516
        %518 = vmatmul.f32.gmra.mxu0 %v452
        %v519 = vpop.f32.mrf.mxu0
        %v520 = vadd.f32 %v464, %v519
        %521 = vmatmul.f32.gmra.mxu0 %v455
        %v522 = vpop.f32.mrf.mxu0
        %v523 = vadd.f32 %v464, %v522
        %524 = vmatmul.f32.gmra.mxu0 %v458
        %v525 = vpop.f32.mrf.mxu0
        %v526 = vadd.f32 %v464, %v525
        %527 = vmatmul.f32.gmra.mxu0 %v461
        %v528 = vpop.f32.mrf.mxu0
        %v529 = vadd.f32 %v464, %v528
        %530 = vdwg.mxu0
        %v531 = vmax.f32 %v484, 0.0
        %v532 = vmax.f32 %v487, 0.0
        %v533 = vmax.f32 %v490, 0.0
        %v534 = vmax.f32 %v493, 0.0
        %v535 = vmax.f32 %v496, 0.0
        %v536 = vmax.f32 %v499, 0.0
        %v537 = vmax.f32 %v502, 0.0
        %v538 = vmax.f32 %v505, 0.0
        %v539 = vmax.f32 %v508, 0.0
        %v540 = vmax.f32 %v511, 0.0
        %v541 = vmax.f32 %v514, 0.0
        %v542 = vmax.f32 %v517, 0.0
        %v543 = vmax.f32 %v520, 0.0
        %v544 = vmax.f32 %v523, 0.0
        %v545 = vmax.f32 %v526, 0.0
        %v546 = vmax.f32 %v529, 0.0
        %v548 = vperm.slane %v397, 0
        %550 = vmatpush.msra.mxu0 %v396
        %551 = vmatpush.msra.mxu0 %v395
        %552 = vmatpush.msra.mxu0 %v394
        %553 = vmatpush.msra.mxu0 %v393
        %554 = vmatpush.msra.mxu0 %v392
        %555 = vmatpush.msra.mxu0 %v391
        %556 = vmatpush.msra.mxu0 %v390
        %557 = vmatpush.msra.mxu0 %v389
        %558 = vmatpush.msra.mxu0 %v388
        %559 = vmatpush.msra.mxu0 %v387
        %560 = vmatpush.msra.mxu0 %v386
        %561 = vmatpush.msra.mxu0 %v385
        %562 = vmatpush.msra.mxu0 %v384
        %563 = vmatpush.msra.mxu0 %v383
        %564 = vmatpush.msra.mxu0 %v382
        %565 = vmatpush.msra.mxu0 %v381
        %566 = vmatmul.f32.gmra.mxu0 %v531
        %v567 = vpop.f32.mrf.mxu0
        %v568 = vadd.f32 %v548, %v567
        %569 = vmatmul.f32.gmra.mxu0 %v532
        %v570 = vpop.f32.mrf.mxu0
        %v571 = vadd.f32 %v548, %v570
        %572 = vmatmul.f32.gmra.mxu0 %v533
        %v573 = vpop.f32.mrf.mxu0
        %v574 = vadd.f32 %v548, %v573
        %575 = vmatmul.f32.gmra.mxu0 %v534
        %v576 = vpop.f32.mrf.mxu0
        %v577 = vadd.f32 %v548, %v576
        %578 = vmatmul.f32.gmra.mxu0 %v535
        %v579 = vpop.f32.mrf.mxu0
        %v580 = vadd.f32 %v548, %v579
        %581 = vmatmul.f32.gmra.mxu0 %v536
        %v582 = vpop.f32.mrf.mxu0
        %v583 = vadd.f32 %v548, %v582
        %584 = vmatmul.f32.gmra.mxu0 %v537
        %v585 = vpop.f32.mrf.mxu0
        %v586 = vadd.f32 %v548, %v585
        %587 = vmatmul.f32.gmra.mxu0 %v538
        %v588 = vpop.f32.mrf.mxu0
        %v589 = vadd.f32 %v548, %v588
        %590 = vmatmul.f32.gmra.mxu0 %v539
        %v591 = vpop.f32.mrf.mxu0
        %v592 = vadd.f32 %v548, %v591
        %593 = vmatmul.f32.gmra.mxu0 %v540
        %v594 = vpop.f32.mrf.mxu0
        %v595 = vadd.f32 %v548, %v594
        %596 = vmatmul.f32.gmra.mxu0 %v541
        %v597 = vpop.f32.mrf.mxu0
        %v598 = vadd.f32 %v548, %v597
        %599 = vmatmul.f32.gmra.mxu0 %v542
        %v600 = vpop.f32.mrf.mxu0
        %v601 = vadd.f32 %v548, %v600
        %602 = vmatmul.f32.gmra.mxu0 %v543
        %v603 = vpop.f32.mrf.mxu0
        %v604 = vadd.f32 %v548, %v603
        %605 = vmatmul.f32.gmra.mxu0 %v544
        %v606 = vpop.f32.mrf.mxu0
        %v607 = vadd.f32 %v548, %v606
        %608 = vmatmul.f32.gmra.mxu0 %v545
        %v609 = vpop.f32.mrf.mxu0
        %v610 = vadd.f32 %v548, %v609
        %611 = vmatmul.f32.gmra.mxu0 %v546
        %v612 = vpop.f32.mrf.mxu0
        %v613 = vadd.f32 %v548, %v612
        %614 = vdwg.mxu0
        %p615 = scmp.eq.s32.totalorder %s24, 2
        // Predicated region
        $region63: #{tpu_custom_call.1} parent=35 // pred_check
          %p616 = pneg %p615
        $region64: #{tpu_custom_call.1} parent=35 // pred_check_branch
          %618 = sbr.rel (%p616) target = $region66
        $region65: #{tpu_custom_call.1} parent=35 // pred_region
          %619 = vst [vmem:[#allocation10] sm:$0xff] %v568
          %620 = vst [vmem:[#allocation10 + $0x8] sm:$0xff] %v571
          %621 = vst [vmem:[#allocation10 + $0x10] sm:$0xff] %v574
          %622 = vst [vmem:[#allocation10 + $0x18] sm:$0xff] %v577
          %623 = vst [vmem:[#allocation10 + $0x20] sm:$0xff] %v580
          %624 = vst [vmem:[#allocation10 + $0x28] sm:$0xff] %v583
          %625 = vst [vmem:[#allocation10 + $0x30] sm:$0xff] %v586
          %626 = vst [vmem:[#allocation10 + $0x38] sm:$0xff] %v589
          %627 = vst [vmem:[#allocation10 + $0x40] sm:$0xff] %v592
          %628 = vst [vmem:[#allocation10 + $0x48] sm:$0xff] %v595
          %629 = vst [vmem:[#allocation10 + $0x50] sm:$0xff] %v598
          %630 = vst [vmem:[#allocation10 + $0x58] sm:$0xff] %v601
          %631 = vst [vmem:[#allocation10 + $0x60] sm:$0xff] %v604
          %632 = vst [vmem:[#allocation10 + $0x68] sm:$0xff] %v607
          %633 = vst [vmem:[#allocation10 + $0x70] sm:$0xff] %v610
          %634 = vst [vmem:[#allocation10 + $0x78] sm:$0xff] %v613
        $region66: #{tpu_custom_call.1} parent=35 // pred_fallthru
          _
        %p635 = scmp.ne.s32.totalorder %s24, 2
        // Predicated region
        $region67: #{tpu_custom_call.1} parent=35 // pred_check
          %p636 = pneg %p635
        $region68: #{tpu_custom_call.1} parent=35 // pred_check_branch
          %638 = sbr.rel (%p636) target = $region70
        $region69: #{tpu_custom_call.1} parent=35 // pred_region
          %v639 = vmax.f32 %v568, 0.0
          %v640 = vmax.f32 %v571, 0.0
          %v641 = vmax.f32 %v574, 0.0
          %v642 = vmax.f32 %v577, 0.0
          %v643 = vmax.f32 %v580, 0.0
          %v644 = vmax.f32 %v583, 0.0
          %v645 = vmax.f32 %v586, 0.0
          %v646 = vmax.f32 %v589, 0.0
          %v647 = vmax.f32 %v592, 0.0
          %v648 = vmax.f32 %v595, 0.0
          %v649 = vmax.f32 %v598, 0.0
          %v650 = vmax.f32 %v601, 0.0
          %v651 = vmax.f32 %v604, 0.0
          %v652 = vmax.f32 %v607, 0.0
          %v653 = vmax.f32 %v610, 0.0
          %v654 = vmax.f32 %v613, 0.0
          %655 = vst [vmem:[#allocation3] sm:$0xff] %v639
          %656 = vst [vmem:[#allocation3 + $0x8] sm:$0xff] %v640
          %657 = vst [vmem:[#allocation3 + $0x10] sm:$0xff] %v641
          %658 = vst [vmem:[#allocation3 + $0x18] sm:$0xff] %v642
          %659 = vst [vmem:[#allocation3 + $0x20] sm:$0xff] %v643
          %660 = vst [vmem:[#allocation3 + $0x28] sm:$0xff] %v644
          %661 = vst [vmem:[#allocation3 + $0x30] sm:$0xff] %v645
          %662 = vst [vmem:[#allocation3 + $0x38] sm:$0xff] %v646
          %663 = vst [vmem:[#allocation3 + $0x40] sm:$0xff] %v647
          %664 = vst [vmem:[#allocation3 + $0x48] sm:$0xff] %v648
          %665 = vst [vmem:[#allocation3 + $0x50] sm:$0xff] %v649
          %666 = vst [vmem:[#allocation3 + $0x58] sm:$0xff] %v650
          %667 = vst [vmem:[#allocation3 + $0x60] sm:$0xff] %v651
          %668 = vst [vmem:[#allocation3 + $0x68] sm:$0xff] %v652
          %669 = vst [vmem:[#allocation3 + $0x70] sm:$0xff] %v653
          %670 = vst [vmem:[#allocation3 + $0x78] sm:$0xff] %v654
        $region70: #{tpu_custom_call.1} parent=35 // pred_fallthru
          _
        // Predicated region
        $region71: #{tpu_custom_call.1} parent=35 // pred_check
          %p671 = pneg %p141
        $region72: #{tpu_custom_call.1} parent=35 // pred_check_branch
          %673 = sbr.rel (%p671) target = $region74
        $region73: #{tpu_custom_call.1} parent=35 // pred_region
          %675 = vsyncadd [#allocation6], 0
          %s676 = sshll.u32 [#allocation10], 4
          %s677 = int_to_ptr.vmem [resolvable:$true] %s676
          %s678 = sshll.u32 %s6, 4
          %s679 = int_to_ptr.hbm [resolvable:$true] %s678
          %684 = dma.vmem_to_hbm [thread:$0]  %s677, 2048, %s679, [#allocation6], 128, 128, 8
        $region74: #{tpu_custom_call.1} parent=35 // pred_fallthru
          _
        // Predicated region
        $region75: #{tpu_custom_call.1} parent=35 // pred_check
          %p685 = pneg %p141
        $region76: #{tpu_custom_call.1} parent=35 // pred_check_branch
          %687 = sbr.rel (%p685) target = $region78
        $region77: #{tpu_custom_call.1} parent=35 // pred_region
          %689 = dma.done [#allocation6], 2048
        $region78: #{tpu_custom_call.1} parent=35 // pred_fallthru
          _
      $region36: #{tpu_custom_call.1} parent=5 // pred_fallthru
        _
      %p690 = scmp.le.s32.totalorder 2, %s19
      // Predicated region
      $region79: #{tpu_custom_call.1} parent=5 // pred_check
        %p691 = pneg %p690
      $region80: #{tpu_custom_call.1} parent=5 // pred_check_branch
        %693 = sbr.rel (%p691) target = $region82
      $region81: #{tpu_custom_call.1} parent=5 // pred_region
        %s694 = ssub.s32 %s19, 2
      $region82: #{tpu_custom_call.1} parent=5 // pred_fallthru
        _
    $region6: #{tpu_custom_call.1} parent=1 // loop_footer
      %s23 = sadd.s32 1, %s19
    $region7: #{tpu_custom_call.1} parent=1 // loop_footer_branch
      %18 = sbr.rel target = $region3
    $region8: #{tpu_custom_call.1} parent=1 // loop_exit
      _
    %695 = vsyncpa [#allocation5], 1
    %s696 = scalar_lea.sflag [#allocation5], 1
    %697 = vsyncpa %s696, 1
    %698 = vsyncpa [#allocation8], 1
    %s699 = scalar_lea.sflag [#allocation8], 1
    %700 = vsyncpa %s699, 1
    %701 = vsyncpa [#allocation6], 1
    %s702 = scalar_lea.sflag [#allocation6], 1
    %703 = vsyncpa %s702, 1

</llo_original>
